<compile_context>
chip_gen: v6e
topology: v6e:2x2x1
jax: 0.10.0
libtpu: 0.0.40
codegen_flags: <defaults>
</compile_context>

<pallas_src>
import numpy as np
import jax
import jax.numpy as jnp
from jax.experimental import pallas as pl
from jax.experimental.pallas import tpu as pltpu


# 3x3 conv tap order (row-major over the kernel window); tap (dy, dx) uses
# weight w[dy + 1, dx + 1].
TAPS3 = [(-1, -1), (-1, 0), (-1, 1),
         (0, -1), (0, 0), (0, 1),
         (1, -1), (1, 0), (1, 1)]
# 2x2 'same' conv / pool corner taps (PyTorch pads 0 left / 1 right for even k).
TAPS2 = [(0, 0), (0, 1), (1, 0), (1, 1)]

# Use pltpu.roll when the raster length is a full lane multiple (>= 1 vreg).
ROLL_MIN_R = 128

CONV_LEVEL = {"conv_1": 1, "conv_2": 2, "conv_3": 3, "conv_4": 4, "conv_5": 5,
              "conv_6": 4, "conv_7": 3, "conv_8": 2, "conv_9": 1}
UP_SRC_LEVEL = {"6": 5, "7": 4, "8": 3, "9": 2}
DECODER = ("conv_6", "conv_7", "conv_8", "conv_9")


def _flat(n, y, x, H, W):
    return (n * H + y) * W + x


def _tap_mask(N, H, W, dy, dx):
    """(1, R) mask: 1 where the source pixel (y+dy, x+dx) is inside the image."""
    m = np.zeros((1, N * H * W), np.float32)
    for n in range(N):
        for y in range(H):
            for x in range(W):
                if 0 <= y + dy < H and 0 <= x + dx < W:
                    m[0, _flat(n, y, x, H, W)] = 1.0
    return m


def _shift_sel_t(N, H, W, dy, dx):
    """S with (A @ S)[:, r(n,y,x)] = A[:, r(n,y+dy,x+dx)] (0 outside image)."""
    R = N * H * W
    S = np.zeros((R, R), np.float32)
    for n in range(N):
        for y in range(H):
            for x in range(W):
                ys, xs = y + dy, x + dx
                if 0 <= ys < H and 0 <= xs < W:
                    S[_flat(n, ys, xs, H, W), _flat(n, y, x, H, W)] = 1.0
    return S


def _pool_sel_t(N, H, W, dy, dx):
    """(A @ P)[:, r(n,i,j)] = A[:, r(n,2i+dy,2j+dx)] -- one 2x2 pooling corner."""
    Ho, Wo = H // 2, W // 2
    P = np.zeros((N * H * W, N * Ho * Wo), np.float32)
    for n in range(N):
        for i in range(Ho):
            for j in range(Wo):
                P[_flat(n, 2 * i + dy, 2 * j + dx, H, W),
                  _flat(n, i, j, Ho, Wo)] = 1.0
    return P


def _upconv_sel_t(N, Hs, Ws, di, dj):
    """Nearest x2 upsample fused with tap (di,dj) of the following 2x2 'same'
    conv: (A @ M)[:, r(n,y,x)] = up2(A)[:, r(n,y+di,x+dj)], zero past edges."""
    Ht, Wt = 2 * Hs, 2 * Ws
    M = np.zeros((N * Hs * Ws, N * Ht * Wt), np.float32)
    for n in range(N):
        for y in range(Ht):
            for x in range(Wt):
                ys, xs = y + di, x + dj
                if ys < Ht and xs < Wt:
                    M[_flat(n, ys // 2, xs // 2, Hs, Ws),
                      _flat(n, y, x, Ht, Wt)] = 1.0
    return M


# -----------------------------------------------------------------------------
# Parameter init (deterministic, PyTorch-default-like uniform bounds).
# Weights are stored as (KH, KW, Cin, Cout), biases as (Cout,).
# -----------------------------------------------------------------------------
def build_params(n, key):
    specs = {
        "conv_1": [(3, 3, 1, n), (3, 3, n, n)],
        "conv_2": [(3, 3, n, 2 * n), (3, 3, 2 * n, 2 * n)],
        "conv_3": [(3, 3, 2 * n, 4 * n), (3, 3, 4 * n, 4 * n)],
        "conv_4": [(3, 3, 4 * n, 8 * n), (3, 3, 8 * n, 8 * n)],
        "conv_5": [(3, 3, 8 * n, 16 * n), (3, 3, 16 * n, 16 * n)],
        "conv_6": [(3, 3, 16 * n, 8 * n), (3, 3, 8 * n, 8 * n)],
        "conv_7": [(3, 3, 8 * n, 4 * n), (3, 3, 4 * n, 4 * n)],
        "conv_8": [(3, 3, 4 * n, 2 * n), (3, 3, 2 * n, 2 * n)],
        "conv_9": [(3, 3, 2 * n, n), (3, 3, n, n)],
        "conv_A": [(1, 1, n, 1)],
        "up_6": [(2, 2, 16 * n, 8 * n)],
        "up_7": [(2, 2, 8 * n, 4 * n)],
        "up_8": [(2, 2, 4 * n, 2 * n)],
        "up_9": [(2, 2, 2 * n, n)],
    }
    params = {}
    for name, shapes in specs.items():
        layer = []
        for shp in shapes:
            key, kw_key, kb_key = jax.random.split(key, 3)
            kh, kw, cin, cout = shp
            bound = 1.0 / float(np.sqrt(cin * kh * kw))
            w = jax.random.uniform(kw_key, shp, jnp.float32, -bound, bound)
            b = jax.random.uniform(kb_key, (cout,), jnp.float32, -bound, bound)
            layer.append((w, b))
        params[name] = layer
    return params


# -----------------------------------------------------------------------------
# pltpu.roll convention probe: it is documented to match jnp.roll; verify the
# sign on a tiny (8, 128) probe once so the conv tap indexing can never flip.
# -----------------------------------------------------------------------------
_ROLL_SIGN = None


def _roll_sign():
    global _ROLL_SIGN
    if _ROLL_SIGN is None:
        def k(x_ref, o_ref):
            o_ref[...] = pltpu.roll(x_ref[...], 1, axis=1)

        x = jnp.arange(8 * 128, dtype=jnp.float32).reshape(8, 128)
        y = pl.pallas_call(
            k,
            out_shape=jax.ShapeDtypeStruct((8, 128), jnp.float32),
            in_specs=[pl.BlockSpec(memory_space=pltpu.MemorySpace.VMEM)],
            out_specs=pl.BlockSpec(memory_space=pltpu.MemorySpace.VMEM),
        )(x)
        _ROLL_SIGN = 1 if bool(jnp.array_equal(y, jnp.roll(x, 1, axis=1))) else -1
    return _ROLL_SIGN


# -----------------------------------------------------------------------------
# Full U-Net forward in one Pallas kernel (transposed (C, N*H*W) dataflow).
# -----------------------------------------------------------------------------
def unet_forward(params, x_nchw):
    N, cin0, H, W = x_nchw.shape
    assert cin0 == 1

    # Spatial geometry per level (level 1 = input resolution, 4 pools below).
    dims = [(H, W)]
    for _ in range(4):
        dims.append((dims[-1][0] // 2, dims[-1][1] // 2))
    assert all(h % 2 == 0 and w % 2 == 0 for h, w in dims[:4])
    rows = [N * h * w for (h, w) in dims]

    # Valid 3x3 taps per level (only the centre tap survives at 1x1 spatial).
    taps3 = [[(dy, dx) for (dy, dx) in TAPS3 if abs(dy) < h and abs(dx) < w]
             for (h, w) in dims]
    roll_lvl = [r >= ROLL_MIN_R and r % 128 == 0 for r in rows]
    sign = _roll_sign()

    # ---- host-precomputed tiny operators & matmul-form weights ---------------
    tensors = {}
    for lvl in range(1, 6):
        h, w = dims[lvl - 1]
        nc = [t for t in taps3[lvl - 1] if t != (0, 0)]
        if not nc:
            continue
        if roll_lvl[lvl - 1]:
            # roll path: just the (T_nc, 1, R) boundary masks
            tensors[f"mask_l{lvl}"] = jnp.asarray(
                np.stack([_tap_mask(N, h, w, dy, dx) for (dy, dx) in nc]))
        else:
            # tiny deep levels: (T_nc, R, R) shift-selection matrices
            tensors[f"sel_l{lvl}"] = jnp.asarray(
                np.stack([_shift_sel_t(N, h, w, dy, dx) for (dy, dx) in nc]))

    for lvl in range(1, 5):
        h, w = dims[lvl - 1]
        tensors[f"pool_l{lvl}"] = jnp.asarray(
            np.stack([_pool_sel_t(N, h, w, dy, dx) for (dy, dx) in TAPS2]))

    for name, src in UP_SRC_LEVEL.items():
        hs, ws = dims[src - 1]
        tensors[f"upmat_{name}"] = jnp.asarray(
            np.stack([_upconv_sel_t(N, hs, ws, di, dj) for (di, dj) in TAPS2]))
        wj, bj = params[f"up_{name}"][0]
        tensors[f"up_{name}_w"] = jnp.stack([wj[di, dj].T for (di, dj) in TAPS2])
        tensors[f"up_{name}_b"] = bj.reshape(-1, 1)

    # 3x3 conv weights, per-tap transposed (Cout, Cin); decoder first convs are
    # split into skip / upsampled halves so no channel concat is ever needed.
    for cname, lvl in CONV_LEVEL.items():
        sel = taps3[lvl - 1]
        (w0, b0), (w1, b1) = params[cname]
        if cname in DECODER:
            ch = w0.shape[2] // 2
            tensors[f"{cname}_w0s"] = jnp.stack(
                [w0[dy + 1, dx + 1, :ch, :].T for (dy, dx) in sel])
            tensors[f"{cname}_w0u"] = jnp.stack(
                [w0[dy + 1, dx + 1, ch:, :].T for (dy, dx) in sel])
        else:
            tensors[f"{cname}_w0"] = jnp.stack(
                [w0[dy + 1, dx + 1].T for (dy, dx) in sel])
        tensors[f"{cname}_b0"] = b0.reshape(-1, 1)
        tensors[f"{cname}_w1"] = jnp.stack(
            [w1[dy + 1, dx + 1].T for (dy, dx) in sel])
        tensors[f"{cname}_b1"] = b1.reshape(-1, 1)

    wA, bA = params["conv_A"][0]
    tensors["convA_w"] = wA[0, 0].T            # (1, n)
    tensors["convA_b"] = bA.reshape(1, 1)

    # input transposed to (1, N*H*W) raster order (C=1 so plain reshape works)
    tensors["x"] = x_nchw.reshape(1, rows[0])

    names = list(tensors.keys())
    idx = {k: i for i, k in enumerate(names)}
    args = [tensors[k] for k in names]

    # ---- the single fused kernel ---------------------------------------------
    def kernel(*refs):
        out_ref = refs[-1]
        in_refs = refs[:-1]

        def full(name):
            return in_refs[idx[name]][...]

        def stk(name, k):
            return in_refs[idx[name]][k]

        def tap_shift(a, lvl, dy, dx, knc):
            """a[:, r] -> a[:, r shifted by (dy,dx)].  Roll path: wrap handled by
            the caller's mask; matmul path: zeros baked into the matrix."""
            w_ = dims[lvl - 1][1]
            R = rows[lvl - 1]
            if roll_lvl[lvl - 1]:
                s = dy * w_ + dx
                return pltpu.roll(a, (sign * (-s)) % R, axis=1)    # XLU, not MXU
            return jnp.dot(a, stk(f"sel_l{lvl}", knc),
                           preferred_element_type=jnp.float32)

        def conv3(acts, wnames, bname, lvl):
            """3x3 'same' conv + ReLU on transposed (C, R) activations.
            acts/wnames may hold two entries (decoder skip + upsampled halves);
            per-tap accumulation, no patch concat."""
            sel = taps3[lvl - 1]
            acc, knc = None, 0
            for kt, (dy, dx) in enumerate(sel):
                center = (dy, dx) == (0, 0)
                srcs = acts if center else [tap_shift(a, lvl, dy, dx, knc)
                                            for a in acts]
                part = None
                for a_s, wn in zip(srcs, wnames):
                    p = jnp.dot(stk(wn, kt), a_s,          # (Cout,Cin)@(Cin,R)
                                preferred_element_type=jnp.float32)
                    part = p if part is None else part + p
                if not center and roll_lvl[lvl - 1]:
                    part = part * stk(f"mask_l{lvl}", knc)  # zero wrapped taps
                acc = part if acc is None else acc + part
                if not center:
                    knc += 1
            return jnp.maximum(acc + full(bname), 0.0)

        def double_conv(acts, cname):
            lvl = CONV_LEVEL[cname]
            w0 = ([f"{cname}_w0s", f"{cname}_w0u"] if cname in DECODER
                  else [f"{cname}_w0"])
            a = conv3(acts, w0, f"{cname}_b0", lvl)
            return conv3([a], [f"{cname}_w1"], f"{cname}_b1", lvl)

        def maxpool(a, lvl):
            pname = f"pool_l{lvl}"
            c = [jnp.dot(a, stk(pname, k), preferred_element_type=jnp.float32)
                 for k in range(4)]
            return jnp.maximum(jnp.maximum(c[0], c[1]),
                               jnp.maximum(c[2], c[3]))

        def up_block(a, name):
            acc = None
            for k in range(4):
                red = jnp.dot(stk(f"up_{name}_w", k), a,     # (Cout, Rlow)
                              preferred_element_type=jnp.float32)
                part = jnp.dot(red, stk(f"upmat_{name}", k),  # (Cout, Rup)
                               preferred_element_type=jnp.float32)
                acc = part if acc is None else acc + part
            return jnp.maximum(acc + full(f"up_{name}_b"), 0.0)

        x = full("x")
        c1 = double_conv([x], "conv_1")
        c2 = double_conv([maxpool(c1, 1)], "conv_2")
        c3 = double_conv([maxpool(c2, 2)], "conv_3")
        c4 = double_conv([maxpool(c3, 3)], "conv_4")
        c5 = double_conv([maxpool(c4, 4)], "conv_5")

        c6 = double_conv([c4, up_block(c5, "6")], "conv_6")
        c7 = double_conv([c3, up_block(c6, "7")], "conv_7")
        c8 = double_conv([c2, up_block(c7, "8")], "conv_8")
        c9 = double_conv([c1, up_block(c8, "9")], "conv_9")

        # Final 1x1 conv + sigmoid; lane-dense (1, N*H*W) HBM store.
        logits = jnp.dot(full("convA_w"), c9,
                         preferred_element_type=jnp.float32) + full("convA_b")
        out_ref[...] = jax.nn.sigmoid(logits)

    out_t = pl.pallas_call(
        kernel,
        out_shape=jax.ShapeDtypeStruct((1, rows[0]), jnp.float32),
        in_specs=[pl.BlockSpec(memory_space=pltpu.MemorySpace.VMEM)] * len(args),
        out_specs=pl.BlockSpec(memory_space=pltpu.MemorySpace.VMEM),
        compiler_params=pltpu.CompilerParams(
            vmem_limit_bytes=16 * 1024 * 1024),
    )(*args)

    # (1, N*H*W) raster order -> (N, 1, H, W)
    return out_t.reshape(N, H, W)[:, None, :, :]


# -----------------------------------------------------------------------------
# Pure-JAX (XLA) reference of the PyTorch forward, for a numerical self-check.
# -----------------------------------------------------------------------------
def unet_reference(params, x):
    hp = jax.lax.Precision.HIGHEST

    def conv(x, w, b, pad):
        y = jax.lax.conv_general_dilated(
            x, w, (1, 1), pad,
            dimension_numbers=("NCHW", "HWIO", "NCHW"), precision=hp)
        return y + b.reshape(1, -1, 1, 1)

    def dconv(x, layer):
        (w0, b0), (w1, b1) = layer
        x = jax.nn.relu(conv(x, w0, b0, ((1, 1), (1, 1))))
        return jax.nn.relu(conv(x, w1, b1, ((1, 1), (1, 1))))

    def pool(x):
        return jax.lax.reduce_window(x, -jnp.inf, jax.lax.max,
                                     (1, 1, 2, 2), (1, 1, 2, 2), "VALID")

    def up(x, layer):
        w, b = layer[0]
        x = jnp.repeat(jnp.repeat(x, 2, axis=2), 2, axis=3)
        return jax.nn.relu(conv(x, w, b, ((0, 1), (0, 1))))

    c1 = dconv(x, params["conv_1"])
    c2 = dconv(pool(c1), params["conv_2"])
    c3 = dconv(pool(c2), params["conv_3"])
    c4 = dconv(pool(c3), params["conv_4"])
    c5 = dconv(pool(c4), params["conv_5"])
    c6 = dconv(jnp.concatenate([c4, up(c5, params["up_6"])], 1), params["conv_6"])
    c7 = dconv(jnp.concatenate([c3, up(c6, params["up_7"])], 1), params["conv_7"])
    c8 = dconv(jnp.concatenate([c2, up(c7, params["up_8"])], 1), params["conv_8"])
    c9 = dconv(jnp.concatenate([c1, up(c8, params["up_9"])], 1), params["conv_9"])
    wA, bA = params["conv_A"][0]
    return jax.nn.sigmoid(conv(c9, wA, bA, ((0, 0), (0, 0))))


if __name__ == "__main__":
    n = 4                      # base channel count (small synthetic config)
    N, H, W = 2, 16, 16        # batch 2, 16x16 single-channel input (NCHW)

    key = jax.random.PRNGKey(0)
    pkey, xkey = jax.random.split(key)
    params = build_params(n, pkey)
    x = jax.random.normal(xkey, (N, 1, H, W), dtype=jnp.float32)

    out = jax.block_until_ready(unet_forward(params, x))

    assert out.shape == (N, 1, H, W), out.shape
    assert out.dtype == jnp.float32
    assert bool(jnp.all(jnp.isfinite(out)))
    assert bool(jnp.all((out >= 0.0) & (out <= 1.0)))   # sigmoid range

    # Numerical self-check vs the XLA reference.  Tolerance is loose enough to
    # absorb MXU f32 pass-precision differences between in-kernel dots and the
    # HIGHEST-precision XLA convs, but far below any structural/indexing error.
    ref = jax.block_until_ready(unet_reference(params, x))
    assert float(jnp.max(jnp.abs(out - ref))) < 3e-2

    print("KERNEL_OK")
</pallas_src>

<mosaic_0001>
module attributes {stable_mosaic.version = 11 : i64} {
  func.func @k(%arg0: memref<8x128xf32, #tpu.memory_space<vmem>>, %arg1: memref<8x128xf32, #tpu.memory_space<vmem>>) attributes {dimension_semantics = [], scalar_prefetch = 0 : i64, scratch_operands = 0 : i64, tpu.core_type = #tpu.core_type<tc>} {
    %c0 = arith.constant 0 : index
    %c0_0 = arith.constant 0 : index
    %0 = vector.load %arg0[%c0, %c0_0] : memref<8x128xf32, #tpu.memory_space<vmem>>, vector<8x128xf32>
    %c1_i32 = arith.constant 1 : i32
    %1 = tpu.dynamic_rotate %0 by %c1_i32 dim 1 : vector<8x128xf32>, i32 -> vector<8x128xf32>
    %c0_1 = arith.constant 0 : index
    %c0_2 = arith.constant 0 : index
    %2 = vector.load %arg1[%c0_1, %c0_2] : memref<8x128xf32, #tpu.memory_space<vmem>>, vector<8x128xf32>
    tpu.vector_store %arg1[%c0_1, %c0_2], %1 {strides = array<i32>} : memref<8x128xf32, #tpu.memory_space<vmem>>, vector<8x128xf32>,
    return
  }
}

</mosaic_0001>

<llo_original>
// kernel: tpu_custom_call.1
$region0: #{tpu_custom_call.1}
  #allocation0 [shape = 'u32[]', space=smem, size = 0x4, offset = 0x4, fixed_abs, tag = 'smem constant byte address 0x4 - core index']
  #allocation1 [shape = 'u32[144,128]{1,0:T(1,128)}', space=vmem, size = 0x12000, scoped, tag = 'internal scratch']
  %s0 = inlined_call_operand.hbm [shape: f32[8,128], index: 0, kind: input, shape index: {}]
  %s1 = inlined_call_operand.hbm [shape: f32[8,128], index: 1, kind: output, shape index: {}]
  %s2 = sld [smem:[#allocation0]]
  $region18: #{tpu_custom_call.1} parent=0
    _
  %s4 = ssub.s32 1, %s2
  %s5 = scalar_select 0, %s4, %s2
  $region1: #{tpu_custom_call.1} parent=0
    #allocation2 [shape = 'u8[4096]{0}', space=vmem, size = 0x1000, scoped, tag = 'input window, operand 0, single buffered']
    #allocation3 [shape = 's32[1]{0}', space=sflag, size = 0x4, scoped, tag = 'scoped memory for tpu_custom_call.1']
    #allocation4 [shape = 's32[1]{0}', space=sflag, size = 0x4, scoped, tag = 'scoped memory for tpu_custom_call.1']
    #allocation5 [shape = 'u8[4096]{0}', space=vmem, size = 0x1000, scoped, tag = 'output window, operand 0, single buffered']
    %6 = vsyncpa [#allocation3], 0
    %7 = vsyncpa [#allocation4], 0
    // Predicated region
    $region2: #{tpu_custom_call.1} parent=1 // pred_check
      _
    $region3: #{tpu_custom_call.1} parent=1 // pred_check_branch
      %9 = sbr.rel (0) target = $region5
    $region4: #{tpu_custom_call.1} parent=1 // pred_region
      %s11 = ssub.s32 128, 128
      %12 = vsyncadd [#allocation3], %s11
      %s14 = sshll.u32 [#allocation2], 4
      %s15 = int_to_ptr.vmem [resolvable:$true] %s14
      %17 = dma.hbm_to_vmem [thread:$0]  %s0, 128, %s15, [#allocation3]
    $region5: #{tpu_custom_call.1} parent=1 // pred_fallthru
      _
    // Predicated region
    $region6: #{tpu_custom_call.1} parent=1 // pred_check
      _
    $region7: #{tpu_custom_call.1} parent=1 // pred_check_branch
      %19 = sbr.rel (0) target = $region9
    $region8: #{tpu_custom_call.1} parent=1 // pred_region
      %20 = dma.done [#allocation3], 128
    $region9: #{tpu_custom_call.1} parent=1 // pred_fallthru
      _
    %v21 = vld [vmem:[#allocation2] sm:$0xff]
    %22 = vrot.lane.b32.xlu0 %v21, 1
    %v23 = vpop.permute.xlu0 %22
    %24 = vst [vmem:[#allocation5] sm:$0xff] %v23
    // Predicated region
    $region10: #{tpu_custom_call.1} parent=1 // pred_check
      _
    $region11: #{tpu_custom_call.1} parent=1 // pred_check_branch
      %26 = sbr.rel (0) target = $region13
    $region12: #{tpu_custom_call.1} parent=1 // pred_region
      %s28 = ssub.s32 128, 128
      %29 = vsyncadd [#allocation4], %s28
      %s31 = sshll.u32 [#allocation5], 4
      %s32 = int_to_ptr.vmem [resolvable:$true] %s31
      %34 = dma.vmem_to_hbm [thread:$0]  %s32, 128, %s1, [#allocation4]
    $region13: #{tpu_custom_call.1} parent=1 // pred_fallthru
      _
    // Predicated region
    $region14: #{tpu_custom_call.1} parent=1 // pred_check
      _
    $region15: #{tpu_custom_call.1} parent=1 // pred_check_branch
      %36 = sbr.rel (0) target = $region17
    $region16: #{tpu_custom_call.1} parent=1 // pred_region
      %37 = dma.done [#allocation4], 128
    $region17: #{tpu_custom_call.1} parent=1 // pred_fallthru
      _
    %38 = vsyncpa [#allocation3], 1
    %39 = vsyncpa [#allocation4], 1

</llo_original>
